<compile_context>
chip_gen: v7x
topology: tpu7x:2x2x1
jax: 0.10.0
libtpu: 0.0.40
codegen_flags: <defaults>
</compile_context>

<pallas_src>
from functools import partial

import jax
import jax.numpy as jnp
from jax.experimental import pallas as pl
from jax.experimental.pallas import tpu as pltpu

VOXEL_DIM = 128  # module-level constant `voxel_dim` in modelAE2.py

# kernel-internal padded sizes
FPAD = 128            # padded ef_dim / hidden width (MXU lane width)
CIN = 16              # padded input-feature rows (3 coords + 1 const + 12 zero); bf16 sublane pack
CONST_IN = 3          # input row that carries a constant 1.0 (bias injection, layer 1)
CONST_CH = 127        # reserved hidden channel kept == 1.0 through every layer (bias carry)

ROW_W1, ROW_W2, ROW_W3Q, ROW_W3G, ROW_WD = 0, 128, 256, 384, 512
W_SLAB_ROWS = 528     # 4 * 128 + 16  (difference head padded to a full bf16 sublane tile)


# ----------------------------------------------------------------------------
# Pallas kernel: seg_decoder + class-1 log-softmax (log_sigmoid form).
# All activations are (feature, point): feature in sublanes, points in lanes.
# Operands arrive as bfloat16; accumulation and the epilogue stay f32.
# ----------------------------------------------------------------------------
def seg_decoder_kernel(pc_ref, q_ref, w_ref, out_ref):
    pc = pc_ref[0]                                     # (CIN, M)    bf16, row 3 == 1
    q = q_ref[0]                                       # (CIN, NPAD) bf16, row 3 == 1

    w1 = w_ref[ROW_W1:ROW_W1 + 128, 0:CIN]             # (128, 16)  lane 3 carries b1
    w2 = w_ref[ROW_W2:ROW_W2 + 128, :]                 # (128, 128) lane 127 carries b2
    w3q = w_ref[ROW_W3Q:ROW_W3Q + 128, 0:CIN]          # (128, 16)
    w3g = w_ref[ROW_W3G:ROW_W3G + 128, :]              # (128, 128) lane 127 carries b3
    wd = w_ref[ROW_WD:ROW_WD + 16, :]                  # (16, 128)  row 0 = w4[:,1]-w4[:,0]

    # --- point-cloud encoder: two MLP layers + global max pool over cloud points ---
    h = jnp.dot(w1, pc, preferred_element_type=jnp.float32)           # (128, M)
    h = jnp.maximum(h, 0.0).astype(jnp.bfloat16)
    h = jnp.dot(w2, h, preferred_element_type=jnp.float32)            # (128, M)
    h = jnp.maximum(h, 0.0)
    g = jnp.max(h, axis=1, keepdims=True)                             # (128, 1); g[127] == 1

    # --- fold the global-feature path into an effective per-query bias ---
    bias_eff = jnp.dot(w3g, g.astype(jnp.bfloat16),
                       preferred_element_type=jnp.float32)            # (128, 1)

    # --- per-query MLP ---
    hq = jnp.dot(w3q, q, preferred_element_type=jnp.float32) + bias_eff
    hq = jnp.maximum(hq, 0.0).astype(jnp.bfloat16)                    # (128, NPAD); row 127 == 1

    # --- class-difference head: diff = logit1 - logit0 (incl. bias diff via row 127) ---
    logits = jnp.dot(wd, hq, preferred_element_type=jnp.float32)      # (16, NPAD)
    diff = logits[0:1, :]                                             # (1, NPAD)

    # F.log_softmax(...)[:, 1]  ==  log_sigmoid(diff), numerically stable form.
    logp1 = jnp.minimum(diff, 0.0) - jnp.log(1.0 + jnp.exp(-jnp.abs(diff)))
    out_ref[0] = logp1                                                # (1, NPAD) lane-dense store


def seg_decoder_forward(point_cloud, expand_point, w_slab):
    """Pallas decoder over the batch grid. Returns (B, 1, NPAD) class-1 log-probs (f32)."""
    B, M, _ = point_cloud.shape
    _, N, _ = expand_point.shape
    npad = max(128, -(-N // 128) * 128)

    def pack_points(pts, n_lanes):
        # (B, P, 3) f32 -> (B, CIN, n_lanes) bf16: rows 0-2 coords, row 3 constant 1.
        P = pts.shape[1]
        out = jnp.zeros((B, CIN, n_lanes), jnp.bfloat16)
        out = out.at[:, 0:3, 0:P].set(jnp.swapaxes(pts, 1, 2).astype(jnp.bfloat16))
        out = out.at[:, CONST_IN, :].set(jnp.bfloat16(1.0))
        return out

    pc_t = pack_points(point_cloud, M)          # (B, 16, M)
    q_t = pack_points(expand_point, npad)       # (B, 16, NPAD); lanes >= N are dummy queries

    grid_spec = pltpu.PrefetchScalarGridSpec(
        num_scalar_prefetch=0,
        grid=(B,),
        in_specs=[
            pl.BlockSpec((1, CIN, M), lambda b: (b, 0, 0)),        # point cloud
            pl.BlockSpec((1, CIN, npad), lambda b: (b, 0, 0)),     # query points
            pl.BlockSpec((W_SLAB_ROWS, FPAD), lambda b: (0, 0)),   # packed weights (grid-invariant)
        ],
        out_specs=pl.BlockSpec((1, 1, npad), lambda b: (b, 0, 0)),
    )
    return pl.pallas_call(
        seg_decoder_kernel,
        out_shape=jax.ShapeDtypeStruct((B, 1, npad), jnp.float32),
        grid_spec=grid_spec,
        compiler_params=pltpu.CompilerParams(dimension_semantics=("parallel",)),
    )(pc_t, q_t, w_slab)


# ----------------------------------------------------------------------------
# bsp_network.forward (inference branch) — glue around the kernel.
# Voxel scatter / IoU stay at XLA level (data-dependent scatter into a 16 MiB
# HBM-resident grid).  Grid prep (reshape/cast/clamp) is fused inside the jit
# and the grid buffer is donated so there is a single full-grid pass per call.
# ----------------------------------------------------------------------------
@partial(jax.jit, donate_argnums=(4,))
def _bsp_forward_jit(w_slab, expand_label, expand_point, point_cloud, point_voxel, scale):
    B, N, _ = expand_point.shape
    V = VOXEL_DIM

    # Kernel already fuses F.log_softmax; `pred` is the class-1 LOG-probability,
    # exactly as in the torch reference (logit[:, 1] after log_softmax).
    logp = seg_decoder_forward(point_cloud, expand_point, w_slab)   # (B, 1, NPAD)
    pred = logp[:, 0, :N]                                           # (B, N)

    # result = copy of point_voxel (torch: zeros(...).copy_(point_voxel)), cast to
    # f32, clamped at max=1 once here.  Clamp commutation with the scatter is valid
    # because the scatter uses .set (replace) and the scattered values are <= 0.
    base = jnp.minimum(point_voxel.reshape(B, V, V, V).astype(jnp.float32), 1.0)

    cloud = expand_point + 0.5                                      # (B, N, 3), >= 0
    vpos = (cloud / scale[:, None, None] * V).astype(jnp.int32)     # trunc == .long()
    bb = jnp.repeat(jnp.arange(B, dtype=jnp.int32), N)              # (B*N,)
    # TODO(synk): out-of-range voxel indices are silently dropped by JAX scatter,
    # whereas torch would raise; in-range for the inputs used here.
    result = base.at[bb,
                     vpos[..., 0].reshape(-1),
                     vpos[..., 1].reshape(-1),
                     vpos[..., 2].reshape(-1)].set(
        jnp.minimum(pred, 1.0).reshape(-1))                         # min() is identity (pred <= 0)

    # ---- IoU accuracy, batched (uses raw pred, as in the torch loop) ----
    label = expand_label.reshape(B, -1).astype(jnp.float32)
    inter = jnp.sum(pred * label, axis=1)
    union = jnp.sum(jnp.minimum(pred + label, 1.0), axis=1)
    acc = jnp.mean(inter / union)
    return result, acc


def bsp_network_forward(params, expand_label, expand_point, point_cloud,
                        point_voxel, scale):
    result, acc = _bsp_forward_jit(params, expand_label, expand_point,
                                   point_cloud, point_voxel, scale)
    return result, float(acc), acc


# ----------------------------------------------------------------------------
# Deterministic parameter init, packed into the kernel's bf16 slab layout.
# Logical weights (row-vector convention h = x @ W + b):
#   w1 (3, ef), w2 (ef, ef), w3q (3, H), w3g (ef, H), w4 (H, 2); zero biases.
# Biases are folded into the slab via the constant-1 input row (lane 3 of w1) and
# the constant-1 hidden channel CONST_CH (lane/row 127), so no bias operand exists.
# ----------------------------------------------------------------------------
def init_params(key, ef_dim, hidden):
    assert ef_dim < FPAD and hidden < FPAD  # channel CONST_CH is reserved for the bias carry
    ks = jax.random.split(key, 5)

    def w(k, shape):
        return jax.random.normal(k, shape, jnp.float32) * 0.1

    w1 = w(ks[0], (3, ef_dim));   b1 = jnp.zeros((ef_dim,), jnp.float32)
    w2 = w(ks[1], (ef_dim, ef_dim)); b2 = jnp.zeros((ef_dim,), jnp.float32)
    w3q = w(ks[2], (3, hidden))
    w3g = w(ks[3], (ef_dim, hidden)); b3 = jnp.zeros((hidden,), jnp.float32)
    w4 = w(ks[4], (hidden, 2));   b4 = jnp.zeros((2,), jnp.float32)

    slab = jnp.zeros((W_SLAB_ROWS, FPAD), jnp.float32)
    # layer 1: (out-channel rows) x (input lanes); lane CONST_IN carries b1.
    slab = slab.at[ROW_W1:ROW_W1 + ef_dim, 0:3].set(w1.T)
    slab = slab.at[ROW_W1:ROW_W1 + ef_dim, CONST_IN].set(b1)
    slab = slab.at[ROW_W1 + CONST_CH, CONST_IN].set(1.0)          # const channel := 1
    # layer 2: lane CONST_CH carries b2; const channel propagated.
    slab = slab.at[ROW_W2:ROW_W2 + ef_dim, 0:ef_dim].set(w2.T)
    slab = slab.at[ROW_W2:ROW_W2 + ef_dim, CONST_CH].set(b2)
    slab = slab.at[ROW_W2 + CONST_CH, CONST_CH].set(1.0)
    # query path of layer 3 (bias arrives via bias_eff, so no const lane here).
    slab = slab.at[ROW_W3Q:ROW_W3Q + hidden, 0:3].set(w3q.T)
    # global-feature path of layer 3: lane CONST_CH carries b3; keeps hq[CONST_CH]==1.
    slab = slab.at[ROW_W3G:ROW_W3G + hidden, 0:ef_dim].set(w3g.T)
    slab = slab.at[ROW_W3G:ROW_W3G + hidden, CONST_CH].set(b3)
    slab = slab.at[ROW_W3G + CONST_CH, CONST_CH].set(1.0)
    # class-difference head: w4[:,1] - w4[:,0], bias diff on the const channel.
    slab = slab.at[ROW_WD, 0:hidden].set(w4[:, 1] - w4[:, 0])
    slab = slab.at[ROW_WD, CONST_CH].set(b4[1] - b4[0])

    return slab.astype(jnp.bfloat16)


if __name__ == "__main__":
    key = jax.random.PRNGKey(0)
    k_pc, k_qp, k_lbl, k_vox, k_par = jax.random.split(key, 5)

    B, M, N = 2, 64, 240          # batch, cloud points, query points
    ef_dim, hidden = 32, 64

    # points in [-0.5, 0.5) so (p + 0.5) / scale * VOXEL_DIM stays in-bounds
    point_cloud = jax.random.uniform(k_pc, (B, M, 3), jnp.float32) - 0.5
    expand_point = jax.random.uniform(k_qp, (B, N, 3), jnp.float32) - 0.5
    expand_label = jax.random.randint(k_lbl, (B, N), 0, 2).astype(jnp.float32)
    point_voxel = jax.random.randint(
        k_vox, (B, 1, VOXEL_DIM, VOXEL_DIM, VOXEL_DIM), 0, 2).astype(jnp.float32)
    scale = jnp.ones((B,), jnp.float32)

    params = init_params(k_par, ef_dim, hidden)

    result, acc, acc_t = bsp_network_forward(
        params, expand_label, expand_point, point_cloud, point_voxel, scale)
    jax.block_until_ready(result)
    jax.block_until_ready(acc_t)

    assert result.shape == (B, VOXEL_DIM, VOXEL_DIM, VOXEL_DIM)
    assert result.dtype == jnp.float32
    print("KERNEL_OK")
</pallas_src>

<mosaic_0001>
module attributes {stable_mosaic.version = 11 : i64} {
  func.func @seg_decoder_kernel(%arg0: i32, %arg1: memref<1x16x64xbf16, #tpu.memory_space<vmem>>, %arg2: memref<1x16x256xbf16, #tpu.memory_space<vmem>>, %arg3: memref<528x128xbf16, #tpu.memory_space<vmem>>, %arg4: memref<1x1x256xf32, #tpu.memory_space<vmem>>) attributes {dimension_semantics = [#tpu.dimension_semantics<parallel>], iteration_bounds = array<i64: 2>, scalar_prefetch = 0 : i64, scratch_operands = 0 : i64, tpu.core_type = #tpu.core_type<tc>, window_params = [{transform_indices = @transform_0, window_bounds = array<i64: 1, 16, 64>}, {transform_indices = @transform_1, window_bounds = array<i64: 1, 16, 256>}, {pipeline_mode = #tpu.pipeline_mode<synchronous>, transform_indices = @transform_2, window_bounds = array<i64: 528, 128>}, {transform_indices = @transform_3, window_bounds = array<i64: 1, 1, 256>}]} {
    %c0 = arith.constant 0 : index
    %c0_0 = arith.constant 0 : index
    %c0_1 = arith.constant 0 : index
    %0 = vector.load %arg1[%c0, %c0_0, %c0_1] : memref<1x16x64xbf16, #tpu.memory_space<vmem>>, vector<1x16x64xbf16>
    %1 = vector.shape_cast %0 : vector<1x16x64xbf16> to vector<16x64xbf16>
    %c0_2 = arith.constant 0 : index
    %c0_3 = arith.constant 0 : index
    %c0_4 = arith.constant 0 : index
    %2 = vector.load %arg2[%c0_2, %c0_3, %c0_4] : memref<1x16x256xbf16, #tpu.memory_space<vmem>>, vector<1x16x256xbf16>
    %3 = vector.shape_cast %2 : vector<1x16x256xbf16> to vector<16x256xbf16>
    %c0_5 = arith.constant 0 : index
    %c0_6 = arith.constant 0 : index
    %4 = vector.load %arg3[%c0_5, %c0_6] : memref<528x128xbf16, #tpu.memory_space<vmem>>, vector<128x16xbf16>
    %c128 = arith.constant 128 : index
    %c0_7 = arith.constant 0 : index
    %5 = vector.load %arg3[%c128, %c0_7] : memref<528x128xbf16, #tpu.memory_space<vmem>>, vector<128x128xbf16>
    %c256 = arith.constant 256 : index
    %c0_8 = arith.constant 0 : index
    %6 = vector.load %arg3[%c256, %c0_8] : memref<528x128xbf16, #tpu.memory_space<vmem>>, vector<128x16xbf16>
    %c384 = arith.constant 384 : index
    %c0_9 = arith.constant 0 : index
    %7 = vector.load %arg3[%c384, %c0_9] : memref<528x128xbf16, #tpu.memory_space<vmem>>, vector<128x128xbf16>
    %c512 = arith.constant 512 : index
    %c0_10 = arith.constant 0 : index
    %8 = vector.load %arg3[%c512, %c0_10] : memref<528x128xbf16, #tpu.memory_space<vmem>>, vector<16x128xbf16>
    %cst = arith.constant dense<0.000000e+00> : vector<128x64xf32>
    %9 = tpu.matmul %4, %1, %cst {dimension_numbers = #tpu.dot_dimension_numbers<[1], [0], [0], [1], [0, 0, 1, 1], [], []>} : vector<128x16xbf16>, vector<16x64xbf16>, vector<128x64xf32> -> vector<128x64xf32>
    %cst_11 = arith.constant 0.000000e+00 : f32
    %10 = vector.broadcast %cst_11 : f32 to vector<128x64xf32>
    %11 = arith.maximumf %9, %10 : vector<128x64xf32>
    %12 = arith.truncf %11 : vector<128x64xf32> to vector<128x64xbf16>
    %cst_12 = arith.constant dense<0.000000e+00> : vector<128x64xf32>
    %13 = tpu.matmul %5, %12, %cst_12 {dimension_numbers = #tpu.dot_dimension_numbers<[1], [0], [0], [1], [0, 0, 1, 1], [], []>} : vector<128x128xbf16>, vector<128x64xbf16>, vector<128x64xf32> -> vector<128x64xf32>
    %cst_13 = arith.constant 0.000000e+00 : f32
    %14 = vector.broadcast %cst_13 : f32 to vector<128x64xf32>
    %15 = arith.maximumf %13, %14 : vector<128x64xf32>
    %cst_14 = arith.constant dense<0xFF800000> : vector<128xf32>
    %16 = vector.multi_reduction <maximumf>, %15, %cst_14 [1] : vector<128x64xf32> to vector<128xf32>
    %17 = vector.shape_cast %16 : vector<128xf32> to vector<128x1xf32>
    %18 = arith.truncf %17 : vector<128x1xf32> to vector<128x1xbf16>
    %cst_15 = arith.constant dense<0.000000e+00> : vector<128x1xf32>
    %19 = tpu.matmul %7, %18, %cst_15 {dimension_numbers = #tpu.dot_dimension_numbers<[1], [0], [0], [1], [0, 0, 1, 1], [], []>} : vector<128x128xbf16>, vector<128x1xbf16>, vector<128x1xf32> -> vector<128x1xf32>
    %cst_16 = arith.constant dense<0.000000e+00> : vector<128x256xf32>
    %20 = tpu.matmul %6, %3, %cst_16 {dimension_numbers = #tpu.dot_dimension_numbers<[1], [0], [0], [1], [0, 0, 1, 1], [], []>} : vector<128x16xbf16>, vector<16x256xbf16>, vector<128x256xf32> -> vector<128x256xf32>
    %21 = vector.broadcast %19 : vector<128x1xf32> to vector<128x256xf32>
    %22 = arith.addf %20, %21 : vector<128x256xf32>
    %cst_17 = arith.constant 0.000000e+00 : f32
    %23 = vector.broadcast %cst_17 : f32 to vector<128x256xf32>
    %24 = arith.maximumf %22, %23 : vector<128x256xf32>
    %25 = arith.truncf %24 : vector<128x256xf32> to vector<128x256xbf16>
    %cst_18 = arith.constant dense<0.000000e+00> : vector<16x256xf32>
    %26 = tpu.matmul %8, %25, %cst_18 {dimension_numbers = #tpu.dot_dimension_numbers<[1], [0], [0], [1], [0, 0, 1, 1], [], []>} : vector<16x128xbf16>, vector<128x256xbf16>, vector<16x256xf32> -> vector<16x256xf32>
    %27 = vector.extract_strided_slice %26 {offsets = [0, 0], sizes = [1, 256], strides = [1, 1]} : vector<16x256xf32> to vector<1x256xf32>
    %cst_19 = arith.constant 0.000000e+00 : f32
    %28 = vector.broadcast %cst_19 : f32 to vector<1x256xf32>
    %29 = arith.minimumf %27, %28 : vector<1x256xf32>
    %30 = math.absf %27 : vector<1x256xf32>
    %cst_20 = arith.constant 0.000000e+00 : f32
    %31 = vector.broadcast %cst_20 : f32 to vector<1x256xf32>
    %32 = arith.subf %31, %30 : vector<1x256xf32>
    %33 = math.exp %32 : vector<1x256xf32>
    %cst_21 = arith.constant 1.000000e+00 : f32
    %34 = vector.broadcast %cst_21 : f32 to vector<1x256xf32>
    %35 = arith.addf %34, %33 : vector<1x256xf32>
    %36 = math.log %35 : vector<1x256xf32>
    %37 = arith.subf %29, %36 : vector<1x256xf32>
    %c0_22 = arith.constant 0 : index
    %c0_23 = arith.constant 0 : index
    %c0_24 = arith.constant 0 : index
    %38 = vector.load %arg4[%c0_22, %c0_23, %c0_24] : memref<1x1x256xf32, #tpu.memory_space<vmem>>, vector<1x1x256xf32>
    %39 = vector.shape_cast %38 : vector<1x1x256xf32> to vector<1x256xf32>
    %40 = vector.shape_cast %37 : vector<1x256xf32> to vector<1x1x256xf32>
    tpu.vector_store %arg4[%c0_22, %c0_23, %c0_24], %40 {strides = array<i32>} : memref<1x1x256xf32, #tpu.memory_space<vmem>>, vector<1x1x256xf32>,
    return
  }
  func.func @transform_0(%arg0: i32) -> (i32, i32, i32) {
    %c0_i32 = arith.constant 0 : i32
    %c0_i32_0 = arith.constant 0 : i32
    %c0_i32_1 = arith.constant 0 : i32
    return %arg0, %c0_i32, %c0_i32_0 : i32, i32, i32
  }
  func.func @transform_1(%arg0: i32) -> (i32, i32, i32) {
    %c0_i32 = arith.constant 0 : i32
    %c0_i32_0 = arith.constant 0 : i32
    %c0_i32_1 = arith.constant 0 : i32
    return %arg0, %c0_i32, %c0_i32_0 : i32, i32, i32
  }
  func.func @transform_2(%arg0: i32) -> (i32, i32) {
    %c0_i32 = arith.constant 0 : i32
    %c0_i32_0 = arith.constant 0 : i32
    %c0_i32_1 = arith.constant 0 : i32
    return %c0_i32, %c0_i32_0 : i32, i32
  }
  func.func @transform_3(%arg0: i32) -> (i32, i32, i32) {
    %c0_i32 = arith.constant 0 : i32
    %c0_i32_0 = arith.constant 0 : i32
    %c0_i32_1 = arith.constant 0 : i32
    return %arg0, %c0_i32, %c0_i32_0 : i32, i32, i32
  }
}

</mosaic_0001>

<llo_original>
// kernel: _bsp_forward_jit.1
$region0: #{_bsp_forward_jit.1}
  #allocation0 [shape = 'u32[]', space=smem, size = 0x4, offset = 0x4, fixed_abs, tag = 'smem constant byte address 0x4 - core index']
  #allocation1 [shape = 'u32[144,128]{1,0:T(1,128)}', space=vmem, size = 0x12000, scoped, tag = 'internal scratch']
  %s0 = inlined_call_operand.vmem [shape: bf16[2,16,64], index: 0, kind: input, shape index: {}]
  %s1 = inlined_call_operand.vmem [shape: bf16[2,16,256], index: 1, kind: input, shape index: {}]
  %s2 = inlined_call_operand.hbm [shape: bf16[528,128], index: 2, kind: input, shape index: {}]
  %s3 = inlined_call_operand.vmem [shape: f32[2,1,256], index: 3, kind: output, shape index: {}]
  %s4 = sld [smem:[#allocation0]]
  $region49: #{_bsp_forward_jit.1} parent=0
    _
  %s6 = ssub.s32 1, %s4
  %s7 = scalar_select 0, %s6, %s4
  $region1: #{_bsp_forward_jit.1} parent=0
    #allocation2 [shape = 'u8[135168]{0}', space=vmem, size = 0x21000, scoped, tag = 'input window, operand 2, single buffered']
    #allocation3 [shape = 's32[2]{0}', space=sflag, size = 0x8, scoped, tag = 'scoped memory for _bsp_forward_jit.1']
    %8 = vsyncpa [#allocation3], 0
    loop: start=0, step=1, limit=4
    $region2: #{_bsp_forward_jit.1} parent=1 // loop_pre_header
      _
    $region3: #{_bsp_forward_jit.1} parent=1 // loop_header
      %s10 = sphi 0, %s14
      %p11 = scmp.ge.s32.totalorder %s10, 4
      %s20 = sphi 0, %s22
      %s23 = sphi 0, %s20
      %s24 = sphi 0, %s23
      %s40 = sphi 0, %s24
      %s46 = sphi 0, %s48
      %s49 = sphi 0, %s46
      %s50 = sphi 0, %s49
      %s66 = sphi 0, %s50
      %s70 = sphi 0, %s70
      %s72 = sphi 0, %s70
      %s73 = sphi 0, %s72
      %s87 = sphi 0, %s73
      %s93 = sphi 0, %s95
      %s96 = sphi 0, %s93
      %s97 = sphi 0, %s96
      %s113 = sphi 0, %s97
    $region4: #{_bsp_forward_jit.1} parent=1 // loop_header_branch
      %13 = sbr.rel (%p11) target = $region8
    $region5: #{_bsp_forward_jit.1} parent=1 // loop_body
      %s15 = ssub.s32 %s10, 1
      %s16 = ssub.s32 %s10, 2
      %s17 = sadd.s32 %s10, 1
      %s18 = ssub.s32 %s10, %s17
      %p19 = scmp.eq.s32.totalorder %s18, 0
      %s21 = sadd.s32 %s20, 1
      %s22 = scalar_select %p19, %s20, %s21
      %p25 = pneg %p19
      %p26 = scmp.eq.s32.totalorder %s10, 1
      %p27 = por %p25, %p26
      %p28 = scmp.ne.s32.totalorder %s20, %s23
      %p29 = scmp.eq.s32.totalorder %s10, 0
      %p30 = por %p28, %p29
      %p31 = scmp.ne.s32.totalorder %s20, %s23
      %p32 = scmp.eq.s32.totalorder %s15, 1
      %p33 = por %p31, %p32
      %p34 = scmp.ne.s32.totalorder %s23, %s24
      %p35 = scmp.eq.s32.totalorder %s15, 0
      %p36 = por %p34, %p35
      %p37 = scmp.ne.s32.totalorder %s23, %s24
      %p38 = scmp.eq.s32.totalorder %s16, 1
      %p39 = por %p37, %p38
      %p41 = scmp.ne.s32.totalorder %s24, %s40
      %p42 = scmp.eq.s32.totalorder %s16, 0
      %p43 = por %p41, %p42
      %s44 = ssub.s32 %s10, %s17
      %p45 = scmp.eq.s32.totalorder %s44, 0
      %s47 = sadd.s32 %s46, 1
      %s48 = scalar_select %p45, %s46, %s47
      %p51 = pneg %p45
      %p52 = scmp.eq.s32.totalorder %s10, 1
      %p53 = por %p51, %p52
      %p54 = scmp.ne.s32.totalorder %s46, %s49
      %p55 = scmp.eq.s32.totalorder %s10, 0
      %p56 = por %p54, %p55
      %p57 = scmp.ne.s32.totalorder %s46, %s49
      %p58 = scmp.eq.s32.totalorder %s15, 1
      %p59 = por %p57, %p58
      %p60 = scmp.ne.s32.totalorder %s49, %s50
      %p61 = scmp.eq.s32.totalorder %s15, 0
      %p62 = por %p60, %p61
      %p63 = scmp.ne.s32.totalorder %s49, %s50
      %p64 = scmp.eq.s32.totalorder %s16, 1
      %p65 = por %p63, %p64
      %p67 = scmp.ne.s32.totalorder %s50, %s66
      %p68 = scmp.eq.s32.totalorder %s16, 0
      %p69 = por %p67, %p68
      %s71 = sadd.s32 %s70, 1
      %p74 = scmp.eq.s32.totalorder %s10, 1
      %p75 = scmp.ne.s32.totalorder %s70, %s72
      %p76 = scmp.eq.s32.totalorder %s10, 0
      %p77 = por %p75, %p76
      %p78 = scmp.ne.s32.totalorder %s70, %s72
      %p79 = scmp.eq.s32.totalorder %s15, 1
      %p80 = por %p78, %p79
      %p81 = scmp.ne.s32.totalorder %s72, %s73
      %p82 = scmp.eq.s32.totalorder %s15, 0
      %p83 = por %p81, %p82
      %p84 = scmp.ne.s32.totalorder %s72, %s73
      %p85 = scmp.eq.s32.totalorder %s16, 1
      %p86 = por %p84, %p85
      %p88 = scmp.ne.s32.totalorder %s73, %s87
      %p89 = scmp.eq.s32.totalorder %s16, 0
      %p90 = por %p88, %p89
      %s91 = ssub.s32 %s10, %s17
      %p92 = scmp.eq.s32.totalorder %s91, 0
      %s94 = sadd.s32 %s93, 1
      %s95 = scalar_select %p92, %s93, %s94
      %p98 = pneg %p92
      %p99 = scmp.eq.s32.totalorder %s10, 1
      %p100 = por %p98, %p99
      %p101 = scmp.ne.s32.totalorder %s93, %s96
      %p102 = scmp.eq.s32.totalorder %s10, 0
      %p103 = por %p101, %p102
      %p104 = scmp.ne.s32.totalorder %s93, %s96
      %p105 = scmp.eq.s32.totalorder %s15, 1
      %p106 = por %p104, %p105
      %p107 = scmp.ne.s32.totalorder %s96, %s97
      %p108 = scmp.eq.s32.totalorder %s15, 0
      %p109 = por %p107, %p108
      %p110 = scmp.ne.s32.totalorder %s96, %s97
      %p111 = scmp.eq.s32.totalorder %s16, 1
      %p112 = por %p110, %p111
      %p114 = scmp.ne.s32.totalorder %s97, %s113
      %p115 = scmp.eq.s32.totalorder %s16, 0
      %p116 = por %p114, %p115
      %p117 = scmp.le.s32.totalorder 1, %s10
      %p118 = scmp.lt.s32.totalorder %s10, 3
      %p119 = pnand %p117, %p118
      %p120 = pneg %p119
      // Predicated region
      $region9: #{_bsp_forward_jit.1} parent=5 // pred_check
        _
      $region10: #{_bsp_forward_jit.1} parent=5 // pred_check_branch
        %122 = sbr.rel (%p119) target = $region12
      $region11: #{_bsp_forward_jit.1} parent=5 // pred_region
        %s123 = ssub.s32 %s10, 1
        // Predicated region
        $region13: #{_bsp_forward_jit.1} parent=11 // pred_check
          %p124 = pneg %p83
        $region14: #{_bsp_forward_jit.1} parent=11 // pred_check_branch
          %126 = sbr.rel (%p124) target = $region16
        $region15: #{_bsp_forward_jit.1} parent=11 // pred_region
          %s128 = ssub.s32 4224, 4224
          %129 = vsyncadd [#allocation3], %s128
          %s130 = sshll.u32 [#allocation2], 4
          %s131 = int_to_ptr.vmem [resolvable:$true] %s130
          %136 = dma.hbm_to_vmem [thread:$0]  %s2, 4224, %s131, [#allocation3], 64, 64, 4
        $region16: #{_bsp_forward_jit.1} parent=11 // pred_fallthru
          _
      $region12: #{_bsp_forward_jit.1} parent=5 // pred_fallthru
        _
      %p137 = scmp.lt.s32.totalorder %s10, 2
      // Predicated region
      $region17: #{_bsp_forward_jit.1} parent=5 // pred_check
        %p138 = pneg %p137
      $region18: #{_bsp_forward_jit.1} parent=5 // pred_check_branch
        %140 = sbr.rel (%p138) target = $region20
      $region19: #{_bsp_forward_jit.1} parent=5 // pred_region
        // Predicated region
        $region21: #{_bsp_forward_jit.1} parent=19 // pred_check
          %p141 = pneg %p30
        $region22: #{_bsp_forward_jit.1} parent=19 // pred_check_branch
          %143 = sbr.rel (%p141) target = $region24
        $region23: #{_bsp_forward_jit.1} parent=19 // pred_region
          %p144 = scmp.lt.s32.totalorder %s10, 1
          %s145 = scalar_select %p144, %s10, 1
          %s146 = smul.addr %s145, 2
          %s147 = smul.addr %s146, 4
          %s148 = scalar_lea.vmem %s0, %s147
        $region24: #{_bsp_forward_jit.1} parent=19 // pred_fallthru
          _
        // Predicated region
        $region25: #{_bsp_forward_jit.1} parent=19 // pred_check
          %p149 = pneg %p56
        $region26: #{_bsp_forward_jit.1} parent=19 // pred_check_branch
          %151 = sbr.rel (%p149) target = $region28
        $region27: #{_bsp_forward_jit.1} parent=19 // pred_region
          %p152 = scmp.lt.s32.totalorder %s10, 1
          %s153 = scalar_select %p152, %s10, 1
          %s154 = smul.addr %s153, 4
          %s155 = smul.addr %s154, 4
          %s156 = scalar_lea.vmem %s1, %s155
        $region28: #{_bsp_forward_jit.1} parent=19 // pred_fallthru
          _
      $region20: #{_bsp_forward_jit.1} parent=5 // pred_fallthru
        _
      %p157 = scmp.le.s32.totalorder 1, %s10
      %p158 = scmp.lt.s32.totalorder %s10, 3
      %p159 = pnand %p157, %p158
      %p160 = pneg %p159
      // Predicated region
      $region29: #{_bsp_forward_jit.1} parent=5 // pred_check
        _
      $region30: #{_bsp_forward_jit.1} parent=5 // pred_check_branch
        %162 = sbr.rel (%p159) target = $region32
      $region31: #{_bsp_forward_jit.1} parent=5 // pred_region
        %s163 = ssub.s32 %s10, 1
        // Predicated region
        $region33: #{_bsp_forward_jit.1} parent=31 // pred_check
          %p164 = pneg %p83
        $region34: #{_bsp_forward_jit.1} parent=31 // pred_check_branch
          %166 = sbr.rel (%p164) target = $region36
        $region35: #{_bsp_forward_jit.1} parent=31 // pred_region
          %167 = dma.done [#allocation3], 4224
        $region36: #{_bsp_forward_jit.1} parent=31 // pred_fallthru
          _
        %p168 = scmp.lt.s32.totalorder %s15, 1
        %s169 = scalar_select %p168, %s15, 1
        %s170 = smul.addr %s169, 2
        %s171 = smul.addr %s170, 4
        %s172 = scalar_lea.vmem %s0, %s171
        %p173 = pneg %p36
        %p174 = pneg %p33
        %p175 = scmp.lt.s32.totalorder %s15, 1
        %s176 = scalar_select %p175, %s15, 1
        %s177 = smul.addr %s176, 4
        %s178 = smul.addr %s177, 4
        %s179 = scalar_lea.vmem %s1, %s178
        %p180 = pneg %p62
        %p181 = pneg %p59
        %p182 = pneg %p83
        %p183 = pneg %p80
        %p184 = pneg %p109
        %p185 = pneg %p106
        %p186 = scmp.lt.s32.totalorder %s15, 1
        %s187 = scalar_select %p186, %s15, 1
        %s188 = smul.addr %s187, 2
        %s189 = scalar_lea.vmem %s3, %s188
        %p190 = scmp.lt.s32.totalorder %s15, 1
        %s191 = scalar_select %p190, %s15, 1
        %s192 = smul.addr %s191, 2
        %s193 = smul.addr %s192, 4
        %s194 = scalar_lea.vmem %s0, %s193
        %p195 = scmp.lt.s32.totalorder %s15, 1
        %s196 = scalar_select %p195, %s15, 1
        %s197 = smul.addr %s196, 4
        %s198 = smul.addr %s197, 4
        %s199 = scalar_lea.vmem %s1, %s198
        %p200 = scmp.lt.s32.totalorder %s15, 1
        %s201 = scalar_select %p200, %s15, 1
        %s202 = smul.addr %s201, 2
        %s203 = scalar_lea.vmem %s3, %s202
        %v205 = vld [vmem:[%s194] sm:$0xf]
        %v206 = vld [vmem:[%s194 + $0x4] sm:$0xf]
        %v207 = vld [vmem:[%s199] sm:$0xff]
        %v208 = vld [vmem:[%s199 + $0x8] sm:$0xff]
        %v209 = vld [vmem:[#allocation2] sm:$0xf]
        %v210 = vld [vmem:[#allocation2 + $0x4] sm:$0xf]
        %v211 = vld [vmem:[#allocation2 + $0x8] sm:$0xf]
        %v212 = vld [vmem:[#allocation2 + $0xc] sm:$0xf]
        %v213 = vld [vmem:[#allocation2 + $0x10] sm:$0xf]
        %v214 = vld [vmem:[#allocation2 + $0x14] sm:$0xf]
        %v215 = vld [vmem:[#allocation2 + $0x18] sm:$0xf]
        %v216 = vld [vmem:[#allocation2 + $0x1c] sm:$0xf]
        %v217 = vld [vmem:[#allocation2 + $0x20] sm:$0xf]
        %v218 = vld [vmem:[#allocation2 + $0x24] sm:$0xf]
        %v219 = vld [vmem:[#allocation2 + $0x28] sm:$0xf]
        %v220 = vld [vmem:[#allocation2 + $0x2c] sm:$0xf]
        %v221 = vld [vmem:[#allocation2 + $0x30] sm:$0xf]
        %v222 = vld [vmem:[#allocation2 + $0x34] sm:$0xf]
        %v223 = vld [vmem:[#allocation2 + $0x38] sm:$0xf]
        %v224 = vld [vmem:[#allocation2 + $0x3c] sm:$0xf]
        %v225 = vld [vmem:[#allocation2 + $0x40] sm:$0xf]
        %v226 = vld [vmem:[#allocation2 + $0x44] sm:$0xf]
        %v227 = vld [vmem:[#allocation2 + $0x48] sm:$0xf]
        %v228 = vld [vmem:[#allocation2 + $0x4c] sm:$0xf]
        %v229 = vld [vmem:[#allocation2 + $0x50] sm:$0xf]
        %v230 = vld [vmem:[#allocation2 + $0x54] sm:$0xf]
        %v231 = vld [vmem:[#allocation2 + $0x58] sm:$0xf]
        %v232 = vld [vmem:[#allocation2 + $0x5c] sm:$0xf]
        %v233 = vld [vmem:[#allocation2 + $0x60] sm:$0xf]
        %v234 = vld [vmem:[#allocation2 + $0x64] sm:$0xf]
        %v235 = vld [vmem:[#allocation2 + $0x68] sm:$0xf]
        %v236 = vld [vmem:[#allocation2 + $0x6c] sm:$0xf]
        %v237 = vld [vmem:[#allocation2 + $0x70] sm:$0xf]
        %v238 = vld [vmem:[#allocation2 + $0x74] sm:$0xf]
        %v239 = vld [vmem:[#allocation2 + $0x78] sm:$0xf]
        %v240 = vld [vmem:[#allocation2 + $0x7c] sm:$0xf]
        %v241 = vld [vmem:[#allocation2 + $0x80] sm:$0xf]
        %v242 = vld [vmem:[#allocation2 + $0x84] sm:$0xf]
        %v243 = vld [vmem:[#allocation2 + $0x88] sm:$0xf]
        %v244 = vld [vmem:[#allocation2 + $0x8c] sm:$0xf]
        %v245 = vld [vmem:[#allocation2 + $0x90] sm:$0xf]
        %v246 = vld [vmem:[#allocation2 + $0x94] sm:$0xf]
        %v247 = vld [vmem:[#allocation2 + $0x98] sm:$0xf]
        %v248 = vld [vmem:[#allocation2 + $0x9c] sm:$0xf]
        %v249 = vld [vmem:[#allocation2 + $0xa0] sm:$0xf]
        %v250 = vld [vmem:[#allocation2 + $0xa4] sm:$0xf]
        %v251 = vld [vmem:[#allocation2 + $0xa8] sm:$0xf]
        %v252 = vld [vmem:[#allocation2 + $0xac] sm:$0xf]
        %v253 = vld [vmem:[#allocation2 + $0xb0] sm:$0xf]
        %v254 = vld [vmem:[#allocation2 + $0xb4] sm:$0xf]
        %v255 = vld [vmem:[#allocation2 + $0xb8] sm:$0xf]
        %v256 = vld [vmem:[#allocation2 + $0xbc] sm:$0xf]
        %v257 = vld [vmem:[#allocation2 + $0xc0] sm:$0xf]
        %v258 = vld [vmem:[#allocation2 + $0xc4] sm:$0xf]
        %v259 = vld [vmem:[#allocation2 + $0xc8] sm:$0xf]
        %v260 = vld [vmem:[#allocation2 + $0xcc] sm:$0xf]
        %v261 = vld [vmem:[#allocation2 + $0xd0] sm:$0xf]
        %v262 = vld [vmem:[#allocation2 + $0xd4] sm:$0xf]
        %v263 = vld [vmem:[#allocation2 + $0xd8] sm:$0xf]
        %v264 = vld [vmem:[#allocation2 + $0xdc] sm:$0xf]
        %v265 = vld [vmem:[#allocation2 + $0xe0] sm:$0xf]
        %v266 = vld [vmem:[#allocation2 + $0xe4] sm:$0xf]
        %v267 = vld [vmem:[#allocation2 + $0xe8] sm:$0xf]
        %v268 = vld [vmem:[#allocation2 + $0xec] sm:$0xf]
        %v269 = vld [vmem:[#allocation2 + $0xf0] sm:$0xf]
        %v270 = vld [vmem:[#allocation2 + $0xf4] sm:$0xf]
        %v271 = vld [vmem:[#allocation2 + $0xf8] sm:$0xf]
        %v272 = vld [vmem:[#allocation2 + $0xfc] sm:$0xf]
        %v273 = vld [vmem:[#allocation2 + $0x100] sm:$0xf]
        %v274 = vld [vmem:[#allocation2 + $0x104] sm:$0xf]
        %v291 = vunpack.c.l.b16 %v209
        %v292 = vunpack.c.l.b16 %v210
        %v293 = vunpack.c.l.b16 %v211
        %v294 = vunpack.c.l.b16 %v212
        %v295 = vunpack.c.l.b16 %v213
        %v296 = vunpack.c.l.b16 %v214
        %v297 = vunpack.c.l.b16 %v215
        %v298 = vunpack.c.l.b16 %v216
        %v299 = vunpack.c.l.b16 %v217
        %v300 = vunpack.c.l.b16 %v218
        %v301 = vunpack.c.l.b16 %v219
        %v302 = vunpack.c.l.b16 %v220
        %v303 = vunpack.c.l.b16 %v221
        %v304 = vunpack.c.l.b16 %v222
        %v305 = vunpack.c.l.b16 %v223
        %v306 = vunpack.c.l.b16 %v224
        %v307 = vpack.c.b16 %v292, %v291
        %v308 = vpack.c.b16 %v294, %v293
        %v309 = vpack.c.b16 %v296, %v295
        %v310 = vpack.c.b16 %v298, %v297
        %v311 = vpack.c.b16 %v300, %v299
        %v312 = vpack.c.b16 %v302, %v301
        %v313 = vpack.c.b16 %v304, %v303
        %v314 = vpack.c.b16 %v306, %v305
        %v317 = vunpack.c.l.b16 %v205
        %v318 = vunpack.c.l.b16 %v206
        %v319 = vpack.c.b16 %v318, %v317
        %vm321 = vcmask 130048
        %v323 = vsel %vm321, %v307, 0
        %v326 = vsel %vm321, %v308, 0
        %v329 = vsel %vm321, %v309, 0
        %v332 = vsel %vm321, %v310, 0
        %v335 = vsel %vm321, %v311, 0
        %v338 = vsel %vm321, %v312, 0
        %v341 = vsel %vm321, %v313, 0
        %v344 = vsel %vm321, %v314, 0
        %346 = vmatprep.subr.bf16.mxu0 0
        %347 = vmatpush1.bf16.msra.mxu0 %v319
        %348 = vmatprep.subr.bf16.mxu0 0
        %349 = vmatpush1.bf16.msra.mxu0 0
        %350 = vmatprep.subr.bf16.mxu0 0
        %351 = vmatpush1.bf16.msra.mxu0 0
        %352 = vmatprep.subr.bf16.mxu0 0
        %353 = vmatpush1.bf16.msra.mxu0 0
        %354 = vmatprep.subr.bf16.mxu0 0
        %355 = vmatpush1.bf16.msra.mxu0 0
        %356 = vmatprep.subr.bf16.mxu0 0
        %357 = vmatpush1.bf16.msra.mxu0 0
        %358 = vmatprep.subr.bf16.mxu0 0
        %359 = vmatpush1.bf16.msra.mxu0 0
        %360 = vmatprep.subr.bf16.mxu0 0
        %361 = vmatpush1.bf16.msra.mxu0 0
        %362 = vmatprep.subr.bf16.mxu0 0
        %363 = vmatpush1.bf16.msra.mxu0 0
        %364 = vmatprep.subr.bf16.mxu0 0
        %365 = vmatpush1.bf16.msra.mxu0 0
        %366 = vmatprep.subr.bf16.mxu0 0
        %367 = vmatpush1.bf16.msra.mxu0 0
        %368 = vmatprep.subr.bf16.mxu0 0
        %369 = vmatpush1.bf16.msra.mxu0 0
        %370 = vmatprep.subr.bf16.mxu0 0
        %371 = vmatpush1.bf16.msra.mxu0 0
        %372 = vmatprep.subr.bf16.mxu0 0
        %373 = vmatpush1.bf16.msra.mxu0 0
        %374 = vmatprep.subr.bf16.mxu0 0
        %375 = vmatpush1.bf16.msra.mxu0 0
        %376 = vmatprep.subr.bf16.mxu0 0
        %377 = vmatpush1.bf16.msra.mxu0 0
        %378 = vmatprep.mubr.bf16.mxu0 0
        %379 = vmatmul.mubr.bf16.gmra.mrb[0].mxu0 %v323
        %v380 = vpop.f32.mrb[0].mxu0
        %v381 = vadd.f32 0.0, %v380
        %v382 = vpop.f32.mrb[0].mxu0
        %v383 = vpop.f32.mrb[0].mxu0
        %v384 = vadd.f32 0.0, %v383
        %v385 = vpop.f32.mrb[0].mxu0
        %386 = vmatprep.mubr.bf16.mxu0 0
        %387 = vmatmul.mubr.bf16.gmra.mrb[0].mxu0 %v326
        %v388 = vpop.f32.mrb[0].mxu0
        %v389 = vadd.f32 0.0, %v388
        %v390 = vpop.f32.mrb[0].mxu0
        %v391 = vpop.f32.mrb[0].mxu0
        %v392 = vadd.f32 0.0, %v391
        %v393 = vpop.f32.mrb[0].mxu0
        %394 = vmatprep.mubr.bf16.mxu0 0
        %395 = vmatmul.mubr.bf16.gmra.mrb[0].mxu0 %v329
        %v396 = vpop.f32.mrb[0].mxu0
        %v397 = vadd.f32 0.0, %v396
        %v398 = vpop.f32.mrb[0].mxu0
        %v399 = vpop.f32.mrb[0].mxu0
        %v400 = vadd.f32 0.0, %v399
        %v401 = vpop.f32.mrb[0].mxu0
        %402 = vmatprep.mubr.bf16.mxu0 0
        %403 = vmatmul.mubr.bf16.gmra.mrb[0].mxu0 %v332
        %v404 = vpop.f32.mrb[0].mxu0
        %v405 = vadd.f32 0.0, %v404
        %v406 = vpop.f32.mrb[0].mxu0
        %v407 = vpop.f32.mrb[0].mxu0
        %v408 = vadd.f32 0.0, %v407
        %v409 = vpop.f32.mrb[0].mxu0
        %410 = vmatprep.mubr.bf16.mxu0 0
        %411 = vmatmul.mubr.bf16.gmra.mrb[0].mxu0 %v335
        %v412 = vpop.f32.mrb[0].mxu0
        %v413 = vadd.f32 0.0, %v412
        %v414 = vpop.f32.mrb[0].mxu0
        %v415 = vpop.f32.mrb[0].mxu0
        %v416 = vadd.f32 0.0, %v415
        %v417 = vpop.f32.mrb[0].mxu0
        %418 = vmatprep.mubr.bf16.mxu0 0
        %419 = vmatmul.mubr.bf16.gmra.mrb[0].mxu0 %v338
        %v420 = vpop.f32.mrb[0].mxu0
        %v421 = vadd.f32 0.0, %v420
        %v422 = vpop.f32.mrb[0].mxu0
        %v423 = vpop.f32.mrb[0].mxu0
        %v424 = vadd.f32 0.0, %v423
        %v425 = vpop.f32.mrb[0].mxu0
        %426 = vmatprep.mubr.bf16.mxu0 0
        %427 = vmatmul.mubr.bf16.gmra.mrb[0].mxu0 %v341
        %v428 = vpop.f32.mrb[0].mxu0
        %v429 = vadd.f32 0.0, %v428
        %v430 = vpop.f32.mrb[0].mxu0
        %v431 = vpop.f32.mrb[0].mxu0
        %v432 = vadd.f32 0.0, %v431
        %v433 = vpop.f32.mrb[0].mxu0
        %434 = vmatprep.mubr.bf16.mxu0 0
        %435 = vmatmul.mubr.bf16.gmra.mrb[0].mxu0 %v344
        %v436 = vpop.f32.mrb[0].mxu0
        %v437 = vadd.f32 0.0, %v436
        %v438 = vpop.f32.mrb[0].mxu0
        %v439 = vpop.f32.mrb[0].mxu0
        %v440 = vadd.f32 0.0, %v439
        %v441 = vpop.f32.mrb[0].mxu0
        %442 = vdwg.mxu0
        %v443 = vmax.f32 %v381, 0.0
        %v444 = vmax.f32 %v384, 0.0
        %v445 = vmax.f32 %v389, 0.0
        %v446 = vmax.f32 %v392, 0.0
        %v447 = vmax.f32 %v397, 0.0
        %v448 = vmax.f32 %v400, 0.0
        %v449 = vmax.f32 %v405, 0.0
        %v450 = vmax.f32 %v408, 0.0
        %v451 = vmax.f32 %v413, 0.0
        %v452 = vmax.f32 %v416, 0.0
        %v453 = vmax.f32 %v421, 0.0
        %v454 = vmax.f32 %v424, 0.0
        %v455 = vmax.f32 %v429, 0.0
        %v456 = vmax.f32 %v432, 0.0
        %v457 = vmax.f32 %v437, 0.0
        %v458 = vmax.f32 %v440, 0.0
        %v459 = vpack.c.bf16 %v444, %v443
        %v460 = vpack.c.bf16 %v446, %v445
        %v461 = vpack.c.bf16 %v448, %v447
        %v462 = vpack.c.bf16 %v450, %v449
        %v463 = vpack.c.bf16 %v452, %v451
        %v464 = vpack.c.bf16 %v454, %v453
        %v465 = vpack.c.bf16 %v456, %v455
        %v466 = vpack.c.bf16 %v458, %v457
        %v483 = vunpack.c.l.b16 %v225
        %v484 = vunpack.c.l.b16 %v226
        %v485 = vunpack.c.l.b16 %v227
        %v486 = vunpack.c.l.b16 %v228
        %v487 = vunpack.c.l.b16 %v229
        %v488 = vunpack.c.l.b16 %v230
        %v489 = vunpack.c.l.b16 %v231
        %v490 = vunpack.c.l.b16 %v232
        %v491 = vunpack.c.l.b16 %v233
        %v492 = vunpack.c.l.b16 %v234
        %v493 = vunpack.c.l.b16 %v235
        %v494 = vunpack.c.l.b16 %v236
        %v495 = vunpack.c.l.b16 %v237
        %v496 = vunpack.c.l.b16 %v238
        %v497 = vunpack.c.l.b16 %v239
        %v498 = vunpack.c.l.b16 %v240
        %v499 = vpack.c.b16 %v484, %v483
        %v500 = vpack.c.b16 %v486, %v485
        %v501 = vpack.c.b16 %v488, %v487
        %v502 = vpack.c.b16 %v490, %v489
        %v503 = vpack.c.b16 %v492, %v491
        %v504 = vpack.c.b16 %v494, %v493
        %v505 = vpack.c.b16 %v496, %v495
        %v506 = vpack.c.b16 %v498, %v497
        %515 = vmatprep.subr.bf16.mxu0 0
        %516 = vmatpush1.bf16.msra.mxu0 %v459
        %517 = vmatprep.subr.bf16.mxu0 0
        %518 = vmatpush1.bf16.msra.mxu0 %v460
        %519 = vmatprep.subr.bf16.mxu0 0
        %520 = vmatpush1.bf16.msra.mxu0 %v461
        %521 = vmatprep.subr.bf16.mxu0 0
        %522 = vmatpush1.bf16.msra.mxu0 %v462
        %523 = vmatprep.subr.bf16.mxu0 0
        %524 = vmatpush1.bf16.msra.mxu0 %v463
        %525 = vmatprep.subr.bf16.mxu0 0
        %526 = vmatpush1.bf16.msra.mxu0 %v464
        %527 = vmatprep.subr.bf16.mxu0 0
        %528 = vmatpush1.bf16.msra.mxu0 %v465
        %529 = vmatprep.subr.bf16.mxu0 0
        %530 = vmatpush1.bf16.msra.mxu0 %v466
        %531 = vmatprep.subr.bf16.mxu0 0
        %532 = vmatpush1.bf16.msra.mxu0 0
        %533 = vmatprep.subr.bf16.mxu0 0
        %534 = vmatpush1.bf16.msra.mxu0 0
        %535 = vmatprep.subr.bf16.mxu0 0
        %536 = vmatpush1.bf16.msra.mxu0 0
        %537 = vmatprep.subr.bf16.mxu0 0
        %538 = vmatpush1.bf16.msra.mxu0 0
        %539 = vmatprep.subr.bf16.mxu0 0
        %540 = vmatpush1.bf16.msra.mxu0 0
        %541 = vmatprep.subr.bf16.mxu0 0
        %542 = vmatpush1.bf16.msra.mxu0 0
        %543 = vmatprep.subr.bf16.mxu0 0
        %544 = vmatpush1.bf16.msra.mxu0 0
        %545 = vmatprep.subr.bf16.mxu0 0
        %546 = vmatpush1.bf16.msra.mxu0 0
        %547 = vmatprep.mubr.bf16.mxu0 0
        %548 = vmatmul.mubr.bf16.gmra.mrb[0].mxu0 %v499
        %v549 = vpop.f32.mrb[0].mxu0
        %v550 = vadd.f32 0.0, %v549
        %v551 = vpop.f32.mrb[0].mxu0
        %v552 = vpop.f32.mrb[0].mxu0
        %v553 = vadd.f32 0.0, %v552
        %v554 = vpop.f32.mrb[0].mxu0
        %555 = vmatprep.mubr.bf16.mxu0 0
        %556 = vmatmul.mubr.bf16.gmra.mrb[0].mxu0 %v500
        %v557 = vpop.f32.mrb[0].mxu0
        %v558 = vadd.f32 0.0, %v557
        %v559 = vpop.f32.mrb[0].mxu0
        %v560 = vpop.f32.mrb[0].mxu0
        %v561 = vadd.f32 0.0, %v560
        %v562 = vpop.f32.mrb[0].mxu0
        %563 = vmatprep.mubr.bf16.mxu0 0
        %564 = vmatmul.mubr.bf16.gmra.mrb[0].mxu0 %v501
        %v565 = vpop.f32.mrb[0].mxu0
        %v566 = vadd.f32 0.0, %v565
        %v567 = vpop.f32.mrb[0].mxu0
        %v568 = vpop.f32.mrb[0].mxu0
        %v569 = vadd.f32 0.0, %v568
        %v570 = vpop.f32.mrb[0].mxu0
        %571 = vmatprep.mubr.bf16.mxu0 0
        %572 = vmatmul.mubr.bf16.gmra.mrb[0].mxu0 %v502
        %v573 = vpop.f32.mrb[0].mxu0
        %v574 = vadd.f32 0.0, %v573
        %v575 = vpop.f32.mrb[0].mxu0
        %v576 = vpop.f32.mrb[0].mxu0
        %v577 = vadd.f32 0.0, %v576
        %v578 = vpop.f32.mrb[0].mxu0
        %579 = vmatprep.mubr.bf16.mxu0 0
        %580 = vmatmul.mubr.bf16.gmra.mrb[0].mxu0 %v503
        %v581 = vpop.f32.mrb[0].mxu0
        %v582 = vadd.f32 0.0, %v581
        %v583 = vpop.f32.mrb[0].mxu0
        %v584 = vpop.f32.mrb[0].mxu0
        %v585 = vadd.f32 0.0, %v584
        %v586 = vpop.f32.mrb[0].mxu0
        %587 = vmatprep.mubr.bf16.mxu0 0
        %588 = vmatmul.mubr.bf16.gmra.mrb[0].mxu0 %v504
        %v589 = vpop.f32.mrb[0].mxu0
        %v590 = vadd.f32 0.0, %v589
        %v591 = vpop.f32.mrb[0].mxu0
        %v592 = vpop.f32.mrb[0].mxu0
        %v593 = vadd.f32 0.0, %v592
        %v594 = vpop.f32.mrb[0].mxu0
        %595 = vmatprep.mubr.bf16.mxu0 0
        %596 = vmatmul.mubr.bf16.gmra.mrb[0].mxu0 %v505
        %v597 = vpop.f32.mrb[0].mxu0
        %v598 = vadd.f32 0.0, %v597
        %v599 = vpop.f32.mrb[0].mxu0
        %v600 = vpop.f32.mrb[0].mxu0
        %v601 = vadd.f32 0.0, %v600
        %v602 = vpop.f32.mrb[0].mxu0
        %603 = vmatprep.mubr.bf16.mxu0 0
        %604 = vmatmul.mubr.bf16.gmra.mrb[0].mxu0 %v506
        %v605 = vpop.f32.mrb[0].mxu0
        %v606 = vadd.f32 0.0, %v605
        %v607 = vpop.f32.mrb[0].mxu0
        %v608 = vpop.f32.mrb[0].mxu0
        %v609 = vadd.f32 0.0, %v608
        %v610 = vpop.f32.mrb[0].mxu0
        %611 = vdwg.mxu0
        %v612 = vmax.f32 %v550, 0.0
        %v613 = vmax.f32 %v553, 0.0
        %v614 = vmax.f32 %v558, 0.0
        %v615 = vmax.f32 %v561, 0.0
        %v616 = vmax.f32 %v566, 0.0
        %v617 = vmax.f32 %v569, 0.0
        %v618 = vmax.f32 %v574, 0.0
        %v619 = vmax.f32 %v577, 0.0
        %v620 = vmax.f32 %v582, 0.0
        %v621 = vmax.f32 %v585, 0.0
        %v622 = vmax.f32 %v590, 0.0
        %v623 = vmax.f32 %v593, 0.0
        %v624 = vmax.f32 %v598, 0.0
        %v625 = vmax.f32 %v601, 0.0
        %v626 = vmax.f32 %v606, 0.0
        %v627 = vmax.f32 %v609, 0.0
        %vm628 = vcmask 523264
        %v629 = vsel %vm628, %v612, -inf
        %630 = vmax.xlane.f32.xlu0 %v629
        %v631 = vpop.xlane.xlu0 %630
        %v632 = vsel %vm628, %v613, -inf
        %633 = vmax.xlane.f32.xlu0 %v632
        %v634 = vpop.xlane.xlu0 %633
        %v635 = vsel %vm628, %v614, -inf
        %636 = vmax.xlane.f32.xlu0 %v635
        %v637 = vpop.xlane.xlu0 %636
        %v638 = vsel %vm628, %v615, -inf
        %639 = vmax.xlane.f32.xlu0 %v638
        %v640 = vpop.xlane.xlu0 %639
        %v641 = vsel %vm628, %v616, -inf
        %642 = vmax.xlane.f32.xlu0 %v641
        %v643 = vpop.xlane.xlu0 %642
        %v644 = vsel %vm628, %v617, -inf
        %645 = vmax.xlane.f32.xlu0 %v644
        %v646 = vpop.xlane.xlu0 %645
        %v647 = vsel %vm628, %v618, -inf
        %648 = vmax.xlane.f32.xlu0 %v647
        %v649 = vpop.xlane.xlu0 %648
        %v650 = vsel %vm628, %v619, -inf
        %651 = vmax.xlane.f32.xlu0 %v650
        %v652 = vpop.xlane.xlu0 %651
        %v653 = vsel %vm628, %v620, -inf
        %654 = vmax.xlane.f32.xlu0 %v653
        %v655 = vpop.xlane.xlu0 %654
        %v656 = vsel %vm628, %v621, -inf
        %657 = vmax.xlane.f32.xlu0 %v656
        %v658 = vpop.xlane.xlu0 %657
        %v659 = vsel %vm628, %v622, -inf
        %660 = vmax.xlane.f32.xlu0 %v659
        %v661 = vpop.xlane.xlu0 %660
        %v662 = vsel %vm628, %v623, -inf
        %663 = vmax.xlane.f32.xlu0 %v662
        %v664 = vpop.xlane.xlu0 %663
        %v665 = vsel %vm628, %v624, -inf
        %666 = vmax.xlane.f32.xlu0 %v665
        %v667 = vpop.xlane.xlu0 %666
        %v668 = vsel %vm628, %v625, -inf
        %669 = vmax.xlane.f32.xlu0 %v668
        %v670 = vpop.xlane.xlu0 %669
        %v671 = vsel %vm628, %v626, -inf
        %672 = vmax.xlane.f32.xlu0 %v671
        %v673 = vpop.xlane.xlu0 %672
        %v674 = vsel %vm628, %v627, -inf
        %675 = vmax.xlane.f32.xlu0 %v674
        %v676 = vpop.xlane.xlu0 %675
        %v677 = vpack.c.bf16 %v634, %v631
        %v678 = vpack.c.bf16 %v640, %v637
        %v679 = vpack.c.bf16 %v646, %v643
        %v680 = vpack.c.bf16 %v652, %v649
        %v681 = vpack.c.bf16 %v658, %v655
        %v682 = vpack.c.bf16 %v664, %v661
        %v683 = vpack.c.bf16 %v670, %v667
        %v684 = vpack.c.bf16 %v676, %v673
        %v701 = vunpack.c.l.b16 %v257
        %v702 = vunpack.c.l.b16 %v258
        %v703 = vunpack.c.l.b16 %v259
        %v704 = vunpack.c.l.b16 %v260
        %v705 = vunpack.c.l.b16 %v261
        %v706 = vunpack.c.l.b16 %v262
        %v707 = vunpack.c.l.b16 %v263
        %v708 = vunpack.c.l.b16 %v264
        %v709 = vunpack.c.l.b16 %v265
        %v710 = vunpack.c.l.b16 %v266
        %v711 = vunpack.c.l.b16 %v267
        %v712 = vunpack.c.l.b16 %v268
        %v713 = vunpack.c.l.b16 %v269
        %v714 = vunpack.c.l.b16 %v270
        %v715 = vunpack.c.l.b16 %v271
        %v716 = vunpack.c.l.b16 %v272
        %v717 = vpack.c.b16 %v702, %v701
        %v718 = vpack.c.b16 %v704, %v703
        %v719 = vpack.c.b16 %v706, %v705
        %v720 = vpack.c.b16 %v708, %v707
        %v721 = vpack.c.b16 %v710, %v709
        %v722 = vpack.c.b16 %v712, %v711
        %v723 = vpack.c.b16 %v714, %v713
        %v724 = vpack.c.b16 %v716, %v715
        %733 = vmatprep.subr.bf16.mxu0 0
        %734 = vmatpush1.bf16.msra.mxu0 %v677
        %735 = vmatprep.subr.bf16.mxu0 0
        %736 = vmatpush1.bf16.msra.mxu0 %v678
        %737 = vmatprep.subr.bf16.mxu0 0
        %738 = vmatpush1.bf16.msra.mxu0 %v679
        %739 = vmatprep.subr.bf16.mxu0 0
        %740 = vmatpush1.bf16.msra.mxu0 %v680
        %741 = vmatprep.subr.bf16.mxu0 0
        %742 = vmatpush1.bf16.msra.mxu0 %v681
        %743 = vmatprep.subr.bf16.mxu0 0
        %744 = vmatpush1.bf16.msra.mxu0 %v682
        %745 = vmatprep.subr.bf16.mxu0 0
        %746 = vmatpush1.bf16.msra.mxu0 %v683
        %747 = vmatprep.subr.bf16.mxu0 0
        %748 = vmatpush1.bf16.msra.mxu0 %v684
        %749 = vmatprep.subr.bf16.mxu0 0
        %750 = vmatpush1.bf16.msra.mxu0 0
        %751 = vmatprep.subr.bf16.mxu0 0
        %752 = vmatpush1.bf16.msra.mxu0 0
        %753 = vmatprep.subr.bf16.mxu0 0
        %754 = vmatpush1.bf16.msra.mxu0 0
        %755 = vmatprep.subr.bf16.mxu0 0
        %756 = vmatpush1.bf16.msra.mxu0 0
        %757 = vmatprep.subr.bf16.mxu0 0
        %758 = vmatpush1.bf16.msra.mxu0 0
        %759 = vmatprep.subr.bf16.mxu0 0
        %760 = vmatpush1.bf16.msra.mxu0 0
        %761 = vmatprep.subr.bf16.mxu0 0
        %762 = vmatpush1.bf16.msra.mxu0 0
        %763 = vmatprep.subr.bf16.mxu0 0
        %764 = vmatpush1.bf16.msra.mxu0 0
        %765 = vmatprep.mubr.bf16.mxu0 0
        %766 = vmatmul.mubr.bf16.gmra.mrb[0].mxu0 %v717
        %v767 = vpop.f32.mrb[0].mxu0
        %v768 = vadd.f32 0.0, %v767
        %v769 = vpop.f32.mrb[0].mxu0
        %v770 = vpop.f32.mrb[0].mxu0
        %v771 = vadd.f32 0.0, %v770
        %v772 = vpop.f32.mrb[0].mxu0
        %773 = vmatprep.mubr.bf16.mxu0 0
        %774 = vmatmul.mubr.bf16.gmra.mrb[0].mxu0 %v718
        %v775 = vpop.f32.mrb[0].mxu0
        %v776 = vadd.f32 0.0, %v775
        %v777 = vpop.f32.mrb[0].mxu0
        %v778 = vpop.f32.mrb[0].mxu0
        %v779 = vadd.f32 0.0, %v778
        %v780 = vpop.f32.mrb[0].mxu0
        %781 = vmatprep.mubr.bf16.mxu0 0
        %782 = vmatmul.mubr.bf16.gmra.mrb[0].mxu0 %v719
        %v783 = vpop.f32.mrb[0].mxu0
        %v784 = vadd.f32 0.0, %v783
        %v785 = vpop.f32.mrb[0].mxu0
        %v786 = vpop.f32.mrb[0].mxu0
        %v787 = vadd.f32 0.0, %v786
        %v788 = vpop.f32.mrb[0].mxu0
        %789 = vmatprep.mubr.bf16.mxu0 0
        %790 = vmatmul.mubr.bf16.gmra.mrb[0].mxu0 %v720
        %v791 = vpop.f32.mrb[0].mxu0
        %v792 = vadd.f32 0.0, %v791
        %v793 = vpop.f32.mrb[0].mxu0
        %v794 = vpop.f32.mrb[0].mxu0
        %v795 = vadd.f32 0.0, %v794
        %v796 = vpop.f32.mrb[0].mxu0
        %797 = vmatprep.mubr.bf16.mxu0 0
        %798 = vmatmul.mubr.bf16.gmra.mrb[0].mxu0 %v721
        %v799 = vpop.f32.mrb[0].mxu0
        %v800 = vadd.f32 0.0, %v799
        %v801 = vpop.f32.mrb[0].mxu0
        %v802 = vpop.f32.mrb[0].mxu0
        %v803 = vadd.f32 0.0, %v802
        %v804 = vpop.f32.mrb[0].mxu0
        %805 = vmatprep.mubr.bf16.mxu0 0
        %806 = vmatmul.mubr.bf16.gmra.mrb[0].mxu0 %v722
        %v807 = vpop.f32.mrb[0].mxu0
        %v808 = vadd.f32 0.0, %v807
        %v809 = vpop.f32.mrb[0].mxu0
        %v810 = vpop.f32.mrb[0].mxu0
        %v811 = vadd.f32 0.0, %v810
        %v812 = vpop.f32.mrb[0].mxu0
        %813 = vmatprep.mubr.bf16.mxu0 0
        %814 = vmatmul.mubr.bf16.gmra.mrb[0].mxu0 %v723
        %v815 = vpop.f32.mrb[0].mxu0
        %v816 = vadd.f32 0.0, %v815
        %v817 = vpop.f32.mrb[0].mxu0
        %v818 = vpop.f32.mrb[0].mxu0
        %v819 = vadd.f32 0.0, %v818
        %v820 = vpop.f32.mrb[0].mxu0
        %821 = vmatprep.mubr.bf16.mxu0 0
        %822 = vmatmul.mubr.bf16.gmra.mrb[0].mxu0 %v724
        %v823 = vpop.f32.mrb[0].mxu0
        %v824 = vadd.f32 0.0, %v823
        %v825 = vpop.f32.mrb[0].mxu0
        %v826 = vpop.f32.mrb[0].mxu0
        %v827 = vadd.f32 0.0, %v826
        %v828 = vpop.f32.mrb[0].mxu0
        %829 = vdwg.mxu0
        %831 = vset.pattern.permute.xlu0 0
        %832 = vperm.xlu0 %831, %v768
        %v833 = vpop.permute.xlu0 %832
        %836 = vset.pattern.permute.xlu0 0
        %837 = vperm.xlu0 %836, %v771
        %v838 = vpop.permute.xlu0 %837
        %841 = vset.pattern.permute.xlu0 0
        %842 = vperm.xlu0 %841, %v776
        %v843 = vpop.permute.xlu0 %842
        %846 = vset.pattern.permute.xlu0 0
        %847 = vperm.xlu0 %846, %v779
        %v848 = vpop.permute.xlu0 %847
        %851 = vset.pattern.permute.xlu0 0
        %852 = vperm.xlu0 %851, %v784
        %v853 = vpop.permute.xlu0 %852
        %856 = vset.pattern.permute.xlu0 0
        %857 = vperm.xlu0 %856, %v787
        %v858 = vpop.permute.xlu0 %857
        %861 = vset.pattern.permute.xlu0 0
        %862 = vperm.xlu0 %861, %v792
        %v863 = vpop.permute.xlu0 %862
        %866 = vset.pattern.permute.xlu0 0
        %867 = vperm.xlu0 %866, %v795
        %v868 = vpop.permute.xlu0 %867
        %871 = vset.pattern.permute.xlu0 0
        %872 = vperm.xlu0 %871, %v800
        %v873 = vpop.permute.xlu0 %872
        %876 = vset.pattern.permute.xlu0 0
        %877 = vperm.xlu0 %876, %v803
        %v878 = vpop.permute.xlu0 %877
        %881 = vset.pattern.permute.xlu0 0
        %882 = vperm.xlu0 %881, %v808
        %v883 = vpop.permute.xlu0 %882
        %886 = vset.pattern.permute.xlu0 0
        %887 = vperm.xlu0 %886, %v811
        %v888 = vpop.permute.xlu0 %887
        %891 = vset.pattern.permute.xlu0 0
        %892 = vperm.xlu0 %891, %v816
        %v893 = vpop.permute.xlu0 %892
        %896 = vset.pattern.permute.xlu0 0
        %897 = vperm.xlu0 %896, %v819
        %v898 = vpop.permute.xlu0 %897
        %901 = vset.pattern.permute.xlu0 0
        %902 = vperm.xlu0 %901, %v824
        %v903 = vpop.permute.xlu0 %902
        %906 = vset.pattern.permute.xlu0 0
        %907 = vperm.xlu0 %906, %v827
        %v908 = vpop.permute.xlu0 %907
        %v926 = vunpack.c.l.b16 %v241
        %v927 = vunpack.c.l.b16 %v242
        %v928 = vunpack.c.l.b16 %v243
        %v929 = vunpack.c.l.b16 %v244
        %v930 = vunpack.c.l.b16 %v245
        %v931 = vunpack.c.l.b16 %v246
        %v932 = vunpack.c.l.b16 %v247
        %v933 = vunpack.c.l.b16 %v248
        %v934 = vunpack.c.l.b16 %v249
        %v935 = vunpack.c.l.b16 %v250
        %v936 = vunpack.c.l.b16 %v251
        %v937 = vunpack.c.l.b16 %v252
        %v938 = vunpack.c.l.b16 %v253
        %v939 = vunpack.c.l.b16 %v254
        %v940 = vunpack.c.l.b16 %v255
        %v941 = vunpack.c.l.b16 %v256
        %v942 = vpack.c.b16 %v927, %v926
        %v943 = vpack.c.b16 %v929, %v928
        %v944 = vpack.c.b16 %v931, %v930
        %v945 = vpack.c.b16 %v933, %v932
        %v946 = vpack.c.b16 %v935, %v934
        %v947 = vpack.c.b16 %v937, %v936
        %v948 = vpack.c.b16 %v939, %v938
        %v949 = vpack.c.b16 %v941, %v940
        %v952 = vunpack.c.l.b16 %v207
        %v953 = vunpack.c.h.b16 %v207
        %v954 = vunpack.c.l.b16 %v208
        %v955 = vunpack.c.h.b16 %v208
        %v956 = vpack.c.b16 %v954, %v952
        %v957 = vpack.c.b16 %v955, %v953
        %v961 = vsel %vm321, %v942, 0
        %v964 = vsel %vm321, %v943, 0
        %v967 = vsel %vm321, %v944, 0
        %v970 = vsel %vm321, %v945, 0
        %v973 = vsel %vm321, %v946, 0
        %v976 = vsel %vm321, %v947, 0
        %v979 = vsel %vm321, %v948, 0
        %v982 = vsel %vm321, %v949, 0
        %984 = vmatprep.subr.bf16.mxu0 %v957
        %985 = vmatpush1.bf16.msra.mxu0 %v956
        %986 = vmatprep.subr.bf16.mxu0 0
        %987 = vmatpush1.bf16.msra.mxu0 0
        %988 = vmatprep.subr.bf16.mxu0 0
        %989 = vmatpush1.bf16.msra.mxu0 0
        %990 = vmatprep.subr.bf16.mxu0 0
        %991 = vmatpush1.bf16.msra.mxu0 0
        %992 = vmatprep.subr.bf16.mxu0 0
        %993 = vmatpush1.bf16.msra.mxu0 0
        %994 = vmatprep.subr.bf16.mxu0 0
        %995 = vmatpush1.bf16.msra.mxu0 0
        %996 = vmatprep.subr.bf16.mxu0 0
        %997 = vmatpush1.bf16.msra.mxu0 0
        %998 = vmatprep.subr.bf16.mxu0 0
        %999 = vmatpush1.bf16.msra.mxu0 0
        %1000 = vmatprep.subr.bf16.mxu0 0
        %1001 = vmatpush1.bf16.msra.mxu0 0
        %1002 = vmatprep.subr.bf16.mxu0 0
        %1003 = vmatpush1.bf16.msra.mxu0 0
        %1004 = vmatprep.subr.bf16.mxu0 0
        %1005 = vmatpush1.bf16.msra.mxu0 0
        %1006 = vmatprep.subr.bf16.mxu0 0
        %1007 = vmatpush1.bf16.msra.mxu0 0
        %1008 = vmatprep.subr.bf16.mxu0 0
        %1009 = vmatpush1.bf16.msra.mxu0 0
        %1010 = vmatprep.subr.bf16.mxu0 0
        %1011 = vmatpush1.bf16.msra.mxu0 0
        %1012 = vmatprep.subr.bf16.mxu0 0
        %1013 = vmatpush1.bf16.msra.mxu0 0
        %1014 = vmatprep.subr.bf16.mxu0 0
        %1015 = vmatpush1.bf16.msra.mxu0 0
        %1016 = vmatprep.mubr.bf16.mxu0 0
        %1017 = vmatmul.mubr.bf16.gmra.mrb[0].mxu0 %v961
        %v1018 = vpop.f32.mrb[0].mxu0
        %v1019 = vadd.f32 %v833, %v1018
        %v1020 = vpop.f32.mrb[0].mxu0
        %v1021 = vadd.f32 %v833, %v1020
        %v1022 = vpop.f32.mrb[0].mxu0
        %v1023 = vadd.f32 %v838, %v1022
        %v1024 = vpop.f32.mrb[0].mxu0
        %v1025 = vadd.f32 %v838, %v1024
        %1026 = vmatprep.mubr.bf16.mxu0 0
        %1027 = vmatmul.mubr.bf16.gmra.mrb[0].mxu0 %v964
        %v1028 = vpop.f32.mrb[0].mxu0
        %v1029 = vadd.f32 %v843, %v1028
        %v1030 = vpop.f32.mrb[0].mxu0
        %v1031 = vadd.f32 %v843, %v1030
        %v1032 = vpop.f32.mrb[0].mxu0
        %v1033 = vadd.f32 %v848, %v1032
        %v1034 = vpop.f32.mrb[0].mxu0
        %v1035 = vadd.f32 %v848, %v1034
        %1036 = vmatprep.mubr.bf16.mxu0 0
        %1037 = vmatmul.mubr.bf16.gmra.mrb[0].mxu0 %v967
        %v1038 = vpop.f32.mrb[0].mxu0
        %v1039 = vadd.f32 %v853, %v1038
        %v1040 = vpop.f32.mrb[0].mxu0
        %v1041 = vadd.f32 %v853, %v1040
        %v1042 = vpop.f32.mrb[0].mxu0
        %v1043 = vadd.f32 %v858, %v1042
        %v1044 = vpop.f32.mrb[0].mxu0
        %v1045 = vadd.f32 %v858, %v1044
        %1046 = vmatprep.mubr.bf16.mxu0 0
        %1047 = vmatmul.mubr.bf16.gmra.mrb[0].mxu0 %v970
        %v1048 = vpop.f32.mrb[0].mxu0
        %v1049 = vadd.f32 %v863, %v1048
        %v1050 = vpop.f32.mrb[0].mxu0
        %v1051 = vadd.f32 %v863, %v1050
        %v1052 = vpop.f32.mrb[0].mxu0
        %v1053 = vadd.f32 %v868, %v1052
        %v1054 = vpop.f32.mrb[0].mxu0
        %v1055 = vadd.f32 %v868, %v1054
        %1056 = vmatprep.mubr.bf16.mxu0 0
        %1057 = vmatmul.mubr.bf16.gmra.mrb[0].mxu0 %v973
        %v1058 = vpop.f32.mrb[0].mxu0
        %v1059 = vadd.f32 %v873, %v1058
        %v1060 = vpop.f32.mrb[0].mxu0
        %v1061 = vadd.f32 %v873, %v1060
        %v1062 = vpop.f32.mrb[0].mxu0
        %v1063 = vadd.f32 %v878, %v1062
        %v1064 = vpop.f32.mrb[0].mxu0
        %v1065 = vadd.f32 %v878, %v1064
        %1066 = vmatprep.mubr.bf16.mxu0 0
        %1067 = vmatmul.mubr.bf16.gmra.mrb[0].mxu0 %v976
        %v1068 = vpop.f32.mrb[0].mxu0
        %v1069 = vadd.f32 %v883, %v1068
        %v1070 = vpop.f32.mrb[0].mxu0
        %v1071 = vadd.f32 %v883, %v1070
        %v1072 = vpop.f32.mrb[0].mxu0
        %v1073 = vadd.f32 %v888, %v1072
        %v1074 = vpop.f32.mrb[0].mxu0
        %v1075 = vadd.f32 %v888, %v1074
        %1076 = vmatprep.mubr.bf16.mxu0 0
        %1077 = vmatmul.mubr.bf16.gmra.mrb[0].mxu0 %v979
        %v1078 = vpop.f32.mrb[0].mxu0
        %v1079 = vadd.f32 %v893, %v1078
        %v1080 = vpop.f32.mrb[0].mxu0
        %v1081 = vadd.f32 %v893, %v1080
        %v1082 = vpop.f32.mrb[0].mxu0
        %v1083 = vadd.f32 %v898, %v1082
        %v1084 = vpop.f32.mrb[0].mxu0
        %v1085 = vadd.f32 %v898, %v1084
        %1086 = vmatprep.mubr.bf16.mxu0 0
        %1087 = vmatmul.mubr.bf16.gmra.mrb[0].mxu0 %v982
        %v1088 = vpop.f32.mrb[0].mxu0
        %v1089 = vadd.f32 %v903, %v1088
        %v1090 = vpop.f32.mrb[0].mxu0
        %v1091 = vadd.f32 %v903, %v1090
        %v1092 = vpop.f32.mrb[0].mxu0
        %v1093 = vadd.f32 %v908, %v1092
        %v1094 = vpop.f32.mrb[0].mxu0
        %v1095 = vadd.f32 %v908, %v1094
        %1096 = vdwg.mxu0
        %v1097 = vmax.f32 %v1019, 0.0
        %v1098 = vmax.f32 %v1021, 0.0
        %v1099 = vmax.f32 %v1023, 0.0
        %v1100 = vmax.f32 %v1025, 0.0
        %v1101 = vmax.f32 %v1029, 0.0
        %v1102 = vmax.f32 %v1031, 0.0
        %v1103 = vmax.f32 %v1033, 0.0
        %v1104 = vmax.f32 %v1035, 0.0
        %v1105 = vmax.f32 %v1039, 0.0
        %v1106 = vmax.f32 %v1041, 0.0
        %v1107 = vmax.f32 %v1043, 0.0
        %v1108 = vmax.f32 %v1045, 0.0
        %v1109 = vmax.f32 %v1049, 0.0
        %v1110 = vmax.f32 %v1051, 0.0
        %v1111 = vmax.f32 %v1053, 0.0
        %v1112 = vmax.f32 %v1055, 0.0
        %v1113 = vmax.f32 %v1059, 0.0
        %v1114 = vmax.f32 %v1061, 0.0
        %v1115 = vmax.f32 %v1063, 0.0
        %v1116 = vmax.f32 %v1065, 0.0
        %v1117 = vmax.f32 %v1069, 0.0
        %v1118 = vmax.f32 %v1071, 0.0
        %v1119 = vmax.f32 %v1073, 0.0
        %v1120 = vmax.f32 %v1075, 0.0
        %v1121 = vmax.f32 %v1079, 0.0
        %v1122 = vmax.f32 %v1081, 0.0
        %v1123 = vmax.f32 %v1083, 0.0
        %v1124 = vmax.f32 %v1085, 0.0
        %v1125 = vmax.f32 %v1089, 0.0
        %v1126 = vmax.f32 %v1091, 0.0
        %v1127 = vmax.f32 %v1093, 0.0
        %v1128 = vmax.f32 %v1095, 0.0
        %v1129 = vpack.c.bf16 %v1099, %v1097
        %v1130 = vpack.c.bf16 %v1100, %v1098
        %v1131 = vpack.c.bf16 %v1103, %v1101
        %v1132 = vpack.c.bf16 %v1104, %v1102
        %v1133 = vpack.c.bf16 %v1107, %v1105
        %v1134 = vpack.c.bf16 %v1108, %v1106
        %v1135 = vpack.c.bf16 %v1111, %v1109
        %v1136 = vpack.c.bf16 %v1112, %v1110
        %v1137 = vpack.c.bf16 %v1115, %v1113
        %v1138 = vpack.c.bf16 %v1116, %v1114
        %v1139 = vpack.c.bf16 %v1119, %v1117
        %v1140 = vpack.c.bf16 %v1120, %v1118
        %v1141 = vpack.c.bf16 %v1123, %v1121
        %v1142 = vpack.c.bf16 %v1124, %v1122
        %v1143 = vpack.c.bf16 %v1127, %v1125
        %v1144 = vpack.c.bf16 %v1128, %v1126
        %v1147 = vunpack.c.l.b16 %v273
        %v1148 = vunpack.c.l.b16 %v274
        %v1149 = vpack.c.b16 %v1148, %v1147
        %1151 = vmatprep.subr.bf16.mxu0 %v1130
        %1152 = vmatpush1.bf16.msra.mxu0 %v1129
        %1153 = vmatprep.subr.bf16.mxu0 %v1132
        %1154 = vmatpush1.bf16.msra.mxu0 %v1131
        %1155 = vmatprep.subr.bf16.mxu0 %v1134
        %1156 = vmatpush1.bf16.msra.mxu0 %v1133
        %1157 = vmatprep.subr.bf16.mxu0 %v1136
        %1158 = vmatpush1.bf16.msra.mxu0 %v1135
        %1159 = vmatprep.subr.bf16.mxu0 %v1138
        %1160 = vmatpush1.bf16.msra.mxu0 %v1137
        %1161 = vmatprep.subr.bf16.mxu0 %v1140
        %1162 = vmatpush1.bf16.msra.mxu0 %v1139
        %1163 = vmatprep.subr.bf16.mxu0 %v1142
        %1164 = vmatpush1.bf16.msra.mxu0 %v1141
        %1165 = vmatprep.subr.bf16.mxu0 %v1144
        %1166 = vmatpush1.bf16.msra.mxu0 %v1143
        %1167 = vmatprep.subr.bf16.mxu0 0
        %1168 = vmatpush1.bf16.msra.mxu0 0
        %1169 = vmatprep.subr.bf16.mxu0 0
        %1170 = vmatpush1.bf16.msra.mxu0 0
        %1171 = vmatprep.subr.bf16.mxu0 0
        %1172 = vmatpush1.bf16.msra.mxu0 0
        %1173 = vmatprep.subr.bf16.mxu0 0
        %1174 = vmatpush1.bf16.msra.mxu0 0
        %1175 = vmatprep.subr.bf16.mxu0 0
        %1176 = vmatpush1.bf16.msra.mxu0 0
        %1177 = vmatprep.subr.bf16.mxu0 0
        %1178 = vmatpush1.bf16.msra.mxu0 0
        %1179 = vmatprep.subr.bf16.mxu0 0
        %1180 = vmatpush1.bf16.msra.mxu0 0
        %1181 = vmatprep.subr.bf16.mxu0 0
        %1182 = vmatpush1.bf16.msra.mxu0 0
        %1183 = vmatprep.mubr.bf16.mxu0 0
        %1184 = vmatmul.mubr.bf16.gmra.mrb[0].mxu0 %v1149
        %v1185 = vpop.f32.mrb[0].mxu0
        %v1186 = vadd.f32 0.0, %v1185
        %v1187 = vpop.f32.mrb[0].mxu0
        %v1188 = vadd.f32 0.0, %v1187
        %v1189 = vpop.f32.mrb[0].mxu0
        %v1190 = vpop.f32.mrb[0].mxu0
        %1191 = vdwg.mxu0
        %v1192 = vmin.f32 %v1186, 0.0
        %v1193 = vmin.f32 %v1188, 0.0
        %v1194 = vand.u32 2147483647, %v1186
        %v1195 = vand.u32 2147483647, %v1188
        %v1196 = vsub.f32 0.0, %v1194
        %v1197 = vsub.f32 0.0, %v1195
        %v1198 = vmul.f32 %v1196, 1.442695
        %v1199 = vpow.pop %v1198
        %v1200 = vmul.f32 %v1197, 1.442695
        %v1201 = vpow.pop %v1200
        %v1202 = vadd.f32 %v1199, 1.0
        %v1203 = vadd.f32 %v1201, 1.0
        %v1204 = vlog2.pop %v1202
        %v1205 = vmul.f32 %v1204, 0.6931472
        %v1206 = vlog2.pop %v1203
        %v1207 = vmul.f32 %v1206, 0.6931472
        %v1208 = vsub.f32 %v1192, %v1205
        %v1209 = vsub.f32 %v1193, %v1207
        %v1212 = vcombine.low %v1208, %v1209
        %v1214 = vunpack.c.l.s4 1966171168
        %v1215 = vunpack.c.0.s8 %v1214
        %v1216 = vlaneseq
        %v1217 = vshrl.u32 %v1216, 7
        %v1218 = vsub.s32 %v1215, %v1217
        %v1219 = vrot.slane %v1212, %v1218
        %v1221 = vunpack.c.l.s4 1966171168
        %v1222 = vunpack.c.0.s8 %v1221
        %v1223 = vlaneseq
        %v1224 = vshrl.u32 %v1223, 7
        %v1225 = vsub.s32 %v1222, %v1224
        %v1226 = vrot.slane %v1219, %v1225
        %v1228 = vlaneseq
        %vm1229 = vcmp.ge.s32.totalorder %v1228, 0
        %vm1230 = vcmp.lt.s32.totalorder %v1228, 256
        %vm1231 = vmand %vm1229, %vm1230
        %1232 = vst.msk [vmem:[%s203] sm:$0x3] %vm1231, %v1226
        %p1233 = scmp.lt.s32.totalorder %s15, 1
        %s1234 = scalar_select %p1233, %s15, 1
        %s1235 = smul.addr %s1234, 2
        %s1236 = scalar_lea.vmem %s3, %s1235
        // Predicated region
        $region37: #{_bsp_forward_jit.1} parent=31 // pred_check
          %p1237 = pneg %p106
        $region38: #{_bsp_forward_jit.1} parent=31 // pred_check_branch
          %1239 = sbr.rel (%p1237) target = $region40
        $region39: #{_bsp_forward_jit.1} parent=31 // pred_region
          _
        $region40: #{_bsp_forward_jit.1} parent=31 // pred_fallthru
          _
      $region32: #{_bsp_forward_jit.1} parent=5 // pred_fallthru
        _
      %p1240 = scmp.le.s32.totalorder 2, %s10
      // Predicated region
      $region41: #{_bsp_forward_jit.1} parent=5 // pred_check
        %p1241 = pneg %p1240
      $region42: #{_bsp_forward_jit.1} parent=5 // pred_check_branch
        %1243 = sbr.rel (%p1241) target = $region44
      $region43: #{_bsp_forward_jit.1} parent=5 // pred_region
        %s1244 = ssub.s32 %s10, 2
        // Predicated region
        $region45: #{_bsp_forward_jit.1} parent=43 // pred_check
          %p1245 = pneg %p112
        $region46: #{_bsp_forward_jit.1} parent=43 // pred_check_branch
          %1247 = sbr.rel (%p1245) target = $region48
        $region47: #{_bsp_forward_jit.1} parent=43 // pred_region
          %p1248 = scmp.lt.s32.totalorder %s16, 1
          %s1249 = scalar_select %p1248, %s16, 1
          %s1250 = smul.addr %s1249, 2
          %s1251 = scalar_lea.vmem %s3, %s1250
        $region48: #{_bsp_forward_jit.1} parent=43 // pred_fallthru
          _
      $region44: #{_bsp_forward_jit.1} parent=5 // pred_fallthru
        _
    $region6: #{_bsp_forward_jit.1} parent=1 // loop_footer
      %s14 = sadd.s32 1, %s10
    $region7: #{_bsp_forward_jit.1} parent=1 // loop_footer_branch
      %9 = sbr.rel target = $region3
    $region8: #{_bsp_forward_jit.1} parent=1 // loop_exit
      _
    %1252 = vsyncpa [#allocation3], 1
    %s1253 = scalar_lea.sflag [#allocation3], 1
    %1254 = vsyncpa %s1253, 1

</llo_original>
